<compile_context>
chip_gen: v7x
topology: tpu7x:2x2x1
jax: 0.10.0
libtpu: 0.0.40
codegen_flags: <defaults>
</compile_context>

<pallas_src>
import jax
import jax.numpy as jnp
from jax.experimental import pallas as pl
from jax.experimental.pallas import tpu as pltpu

INPUT_SIZE = 32
Z_SIZE = 32
N_COMPONENTS = 4
KZ = N_COMPONENTS * Z_SIZE           # 128
OUT_LANES = 128                      # z | mu | logsigma | pad (32 lanes each)
IN_LANES = 2 * KZ                    # packed input slab: ctx|gumbel|pad|eps = 256 lanes
EPS_LANE = KZ                        # eps starts at lane 128 (lane-aligned)
WIDE = 2 * KZ + Z_SIZE               # fused mu | logsigma | pi1 projection = 288 lanes
Z_SHIFT = Z_SIZE.bit_length() - 1    # 5 (Z_SIZE is a power of two)
assert (1 << Z_SHIFT) == Z_SIZE
GUMBEL_TAU = 0.1                     # hard gumbel-softmax forward is tau-invariant


def mix_variation_kernel(
    x_ref,                                   # [TB, 256] ctx|gumbel|pad|eps
    w_fc1, b_fc1, w_fc2, b_fc2,
    w_wide, b_wide,                          # [32, 288], [1, 288]: mu|logsigma|pi1
    w_pi2, b_pi2,                            # [32, 4] bf16, [1, 4] f32
    fold_ref,                                # [384, 128] 0/1 constant
    out_ref,                                 # [TB, 128] z|mu|logsigma|pad
):
    TB = x_ref.shape[0]
    K, Z = N_COMPONENTS, Z_SIZE

    ctx = x_ref[:, 0:INPUT_SIZE]                          # [TB, 32]
    gum = x_ref[:, INPUT_SIZE:INPUT_SIZE + K]             # [TB, 4]
    eps = x_ref[:, EPS_LANE:EPS_LANE + KZ]                # [TB, 128] (lane-aligned)

    # self.fc : Linear -> Tanh -> Linear -> Tanh
    h = jnp.tanh(jnp.dot(ctx, w_fc1[...], preferred_element_type=jnp.float32) + b_fc1[...])
    c = jnp.tanh(jnp.dot(h, w_fc2[...], preferred_element_type=jnp.float32) + b_fc2[...])

    # One wide lane-dense matmul off c: mu(0:128) | logsigma(128:256) | pi1(256:288)
    wide = jnp.dot(c, w_wide[...], preferred_element_type=jnp.float32) + b_wide[...]
    mus = wide[:, 0:KZ]
    logsigmas = jnp.clip(wide[:, KZ:2 * KZ], -20.0, 20.0)
    p = jnp.tanh(wide[:, 2 * KZ:2 * KZ + Z])              # [TB, 32]

    # pi_net second layer in bf16: its only consumer is the argmax below.
    logits = jnp.dot(p.astype(jnp.bfloat16), w_pi2[...],
                     preferred_element_type=jnp.float32) + b_pi2[...]     # [TB, K]

    # F.gumbel_softmax(..., tau, hard=True) forward value = one_hot(argmax(logits + g)).
    # Dividing by a positive tau does not change the argmax, so skip "/ GUMBEL_TAU".
    g = logits + gum
    lane_k = jax.lax.broadcasted_iota(jnp.int32, (TB, K), 1)
    gmax = jnp.max(g, axis=-1, keepdims=True)
    # first index attaining the max (matches torch.max tie-breaking)
    idx = jnp.min(jnp.where(g >= gmax, lane_k, K), axis=-1, keepdims=True)  # [TB, 1]

    stds = jnp.exp(0.5 * logsigmas)
    zi = eps * stds + mus                                                   # [TB, KZ]

    # Hard mixture selection as a lane-dense mask over [TB, K*Z]:
    # mask[b, k*Z + d] = 1 iff k == argmax component for row b.
    lane_kz = jax.lax.broadcasted_iota(jnp.int32, (TB, KZ), 1)
    mask = ((lane_kz >> Z_SHIFT) == idx).astype(jnp.float32)                # [TB, KZ]

    # Single fused fold matmul against the precomputed constant: selects the
    # argmax component and packs z|mu|logsigma into 128 dense output lanes.
    big = jnp.concatenate([mask * zi, mask * mus, mask * logsigmas], axis=1)  # [TB, 384]
    out_ref[...] = jnp.dot(big, fold_ref[...], preferred_element_type=jnp.float32)


def _make_fold():
    """[3*KZ, 128] 0/1 matrix: row (s*KZ + k*Z + d) -> output lane (s*Z + d)."""
    rows = jnp.arange(3 * KZ)
    target = (rows // KZ) * Z_SIZE + (rows % Z_SIZE)
    cols = jnp.arange(OUT_LANES)
    return (target[:, None] == cols[None, :]).astype(jnp.float32)


def pack_params(raw):
    """Host-side, once-per-model packing of the 12 raw Linear params."""
    (w_fc1, b_fc1, w_fc2, b_fc2, w_pi1, b_pi1, w_pi2, b_pi2,
     w_mu, b_mu, w_ls, b_ls) = raw
    # Fuse mu | logsigma | pi1 projections (pi1 last so mu/ls slices stay 128-aligned).
    w_wide = jnp.concatenate([w_mu, w_ls, w_pi1], axis=1)       # [Z, 288]
    b_wide = jnp.concatenate([b_mu, b_ls, b_pi1], axis=1)       # [1, 288]
    return (w_fc1, b_fc1, w_fc2, b_fc2, w_wide, b_wide,
            w_pi2.astype(jnp.bfloat16), b_pi2, _make_fold())


def init_params(key):
    """Deterministic init matching m.weight.uniform_(-0.02, 0.02), bias = 0."""
    def lin(k, fan_in, fan_out):
        w = jax.random.uniform(k, (fan_in, fan_out), jnp.float32, -0.02, 0.02)
        b = jnp.zeros((1, fan_out), jnp.float32)
        return w, b

    ks = jax.random.split(key, 6)
    w_fc1, b_fc1 = lin(ks[0], INPUT_SIZE, Z_SIZE)
    w_fc2, b_fc2 = lin(ks[1], Z_SIZE, Z_SIZE)
    w_pi1, b_pi1 = lin(ks[2], Z_SIZE, Z_SIZE)
    w_pi2, b_pi2 = lin(ks[3], Z_SIZE, N_COMPONENTS)
    w_mu, b_mu = lin(ks[4], Z_SIZE, N_COMPONENTS * Z_SIZE)
    w_ls, b_ls = lin(ks[5], Z_SIZE, N_COMPONENTS * Z_SIZE)
    raw = (w_fc1, b_fc1, w_fc2, b_fc2, w_pi1, b_pi1, w_pi2, b_pi2,
           w_mu, b_mu, w_ls, b_ls)
    return pack_params(raw)


def _round_up(x, m):
    return (x + m - 1) // m * m


def mix_variation_forward(context, gumbel, eps, params, block_b=2048):
    B = context.shape[0]
    (w_fc1, b_fc1, w_fc2, b_fc2, w_wide, b_wide, w_pi2, b_pi2, fold) = params

    # Lane-dense packed input slab: ctx(0:32) | gumbel(32:36) | 0-pad | eps(128:256).
    mid_pad = jnp.zeros((B, EPS_LANE - INPUT_SIZE - N_COMPONENTS), context.dtype)
    packed = jnp.concatenate([context, gumbel, mid_pad, eps], axis=1)   # [B, 256]

    # Batch tile: rows multiple of 8 (f32 sublanes), <= block_b rows/step, and at
    # least 2 grid steps when B >= 16 so both v7x TensorCores get a share.
    n_tiles = max(1, pl.cdiv(B, block_b))
    if B >= 16:
        n_tiles = max(n_tiles, 2)
    tb = _round_up(pl.cdiv(B, n_tiles), 8)
    b_pad = _round_up(B, tb)
    if b_pad != B:
        packed = jnp.pad(packed, ((0, b_pad - B), (0, 0)))
    grid = (b_pad // tb,)

    def const_spec(arr):
        return pl.BlockSpec(arr.shape, lambda i: (0, 0))

    weights = (w_fc1, b_fc1, w_fc2, b_fc2, w_wide, b_wide, w_pi2, b_pi2, fold)
    in_specs = [pl.BlockSpec((tb, IN_LANES), lambda i: (i, 0))]
    in_specs += [const_spec(w) for w in weights]

    weight_bytes = sum(int(w.size) * w.dtype.itemsize for w in weights)
    flops = 2 * b_pad * (INPUT_SIZE * Z_SIZE          # fc1
                         + Z_SIZE * Z_SIZE            # fc2
                         + Z_SIZE * WIDE              # fused mu|logsigma|pi1
                         + Z_SIZE * N_COMPONENTS      # pi2
                         + 3 * KZ * OUT_LANES)        # fold
    cost = pl.CostEstimate(
        flops=flops,
        transcendentals=b_pad * (3 * Z_SIZE + KZ),    # 3 tanh rows + exp row
        bytes_accessed=b_pad * (IN_LANES + OUT_LANES) * 4 + weight_bytes,
    )

    out = pl.pallas_call(
        mix_variation_kernel,
        out_shape=jax.ShapeDtypeStruct((b_pad, OUT_LANES), jnp.float32),
        grid=grid,
        in_specs=in_specs,
        out_specs=pl.BlockSpec((tb, OUT_LANES), lambda i: (i, 0)),
        compiler_params=pltpu.CompilerParams(
            dimension_semantics=("parallel",)),
        cost_estimate=cost,
    )(packed, *weights)

    # Lane-dense output slab: z | mu | logsigma | pad  -> split in the wrapper.
    z = out[:B, 0:Z_SIZE]
    mu = out[:B, Z_SIZE:2 * Z_SIZE]
    logsigma = out[:B, 2 * Z_SIZE:3 * Z_SIZE]
    # Match PyTorch return shapes: z [B, Z], mu [B, 1, Z], logsigma [B, 1, Z]
    # TODO(synk): straight-through gumbel-softmax gradient not implemented
    # (forward-only); a custom_vjp would be needed to match autograd.
    return z, mu[:, None, :], logsigma[:, None, :]


if __name__ == "__main__":
    B = 8
    key = jax.random.PRNGKey(0)
    k_ctx, k_gum, k_eps, k_par = jax.random.split(key, 4)

    context = jax.random.normal(k_ctx, (B, INPUT_SIZE), jnp.float32)
    gumbel = jax.random.gumbel(k_gum, (B, N_COMPONENTS), jnp.float32)
    eps = jax.random.normal(k_eps, (B, N_COMPONENTS * Z_SIZE), jnp.float32)
    params = init_params(k_par)

    z, mu, logsigma = mix_variation_forward(context, gumbel, eps, params)
    jax.block_until_ready((z, mu, logsigma))

    assert z.shape == (B, Z_SIZE)
    assert mu.shape == (B, 1, Z_SIZE)
    assert logsigma.shape == (B, 1, Z_SIZE)
    print("KERNEL_OK")
</pallas_src>

<mosaic_0001>
module attributes {stable_mosaic.version = 11 : i64} {
  func.func @mix_variation_kernel(%arg0: i32, %arg1: memref<8x256xf32, #tpu.memory_space<vmem>>, %arg2: memref<32x32xf32, #tpu.memory_space<vmem>>, %arg3: memref<1x32xf32, #tpu.memory_space<vmem>>, %arg4: memref<32x32xf32, #tpu.memory_space<vmem>>, %arg5: memref<1x32xf32, #tpu.memory_space<vmem>>, %arg6: memref<32x288xf32, #tpu.memory_space<vmem>>, %arg7: memref<1x288xf32, #tpu.memory_space<vmem>>, %arg8: memref<32x4xbf16, #tpu.memory_space<vmem>>, %arg9: memref<1x4xf32, #tpu.memory_space<vmem>>, %arg10: memref<384x128xf32, #tpu.memory_space<vmem>>, %arg11: memref<8x128xf32, #tpu.memory_space<vmem>>) attributes {dimension_semantics = [#tpu.dimension_semantics<parallel>], iteration_bounds = array<i64: 1>, scalar_prefetch = 0 : i64, scratch_operands = 0 : i64, tpu.core_type = #tpu.core_type<tc>, window_params = [{transform_indices = @transform_0, window_bounds = array<i64: 8, 256>}, {pipeline_mode = #tpu.pipeline_mode<synchronous>, transform_indices = @transform_1, window_bounds = array<i64: 32, 32>}, {pipeline_mode = #tpu.pipeline_mode<synchronous>, transform_indices = @transform_2, window_bounds = array<i64: 1, 32>}, {pipeline_mode = #tpu.pipeline_mode<synchronous>, transform_indices = @transform_3, window_bounds = array<i64: 32, 32>}, {pipeline_mode = #tpu.pipeline_mode<synchronous>, transform_indices = @transform_4, window_bounds = array<i64: 1, 32>}, {pipeline_mode = #tpu.pipeline_mode<synchronous>, transform_indices = @transform_5, window_bounds = array<i64: 32, 288>}, {pipeline_mode = #tpu.pipeline_mode<synchronous>, transform_indices = @transform_6, window_bounds = array<i64: 1, 288>}, {pipeline_mode = #tpu.pipeline_mode<synchronous>, transform_indices = @transform_7, window_bounds = array<i64: 32, 4>}, {pipeline_mode = #tpu.pipeline_mode<synchronous>, transform_indices = @transform_8, window_bounds = array<i64: 1, 4>}, {pipeline_mode = #tpu.pipeline_mode<synchronous>, transform_indices = @transform_9, window_bounds = array<i64: 384, 128>}, {transform_indices = @transform_10, window_bounds = array<i64: 8, 128>}]} {
    %c0 = arith.constant 0 : index
    %c0_0 = arith.constant 0 : index
    %0 = vector.load %arg1[%c0, %c0_0] : memref<8x256xf32, #tpu.memory_space<vmem>>, vector<8x32xf32>
    %c0_1 = arith.constant 0 : index
    %c32 = arith.constant 32 : index
    %1 = vector.load %arg1[%c0_1, %c32] : memref<8x256xf32, #tpu.memory_space<vmem>>, vector<8x4xf32>
    %c0_2 = arith.constant 0 : index
    %c128 = arith.constant 128 : index
    %2 = vector.load %arg1[%c0_2, %c128] : memref<8x256xf32, #tpu.memory_space<vmem>>, vector<8x128xf32>
    %c0_3 = arith.constant 0 : index
    %c0_4 = arith.constant 0 : index
    %3 = vector.load %arg2[%c0_3, %c0_4] : memref<32x32xf32, #tpu.memory_space<vmem>>, vector<32x32xf32>
    %cst = arith.constant dense<0.000000e+00> : vector<8x32xf32>
    %4 = tpu.matmul %0, %3, %cst {dimension_numbers = #tpu.dot_dimension_numbers<[1], [0], [0], [1], [0, 0, 1, 1], [], []>} : vector<8x32xf32>, vector<32x32xf32>, vector<8x32xf32> -> vector<8x32xf32>
    %c0_5 = arith.constant 0 : index
    %c0_6 = arith.constant 0 : index
    %5 = vector.load %arg3[%c0_5, %c0_6] : memref<1x32xf32, #tpu.memory_space<vmem>>, vector<1x32xf32>
    %6 = vector.broadcast %5 : vector<1x32xf32> to vector<8x32xf32>
    %7 = arith.addf %4, %6 : vector<8x32xf32>
    %8 = math.tanh %7 : vector<8x32xf32>
    %c0_7 = arith.constant 0 : index
    %c0_8 = arith.constant 0 : index
    %9 = vector.load %arg4[%c0_7, %c0_8] : memref<32x32xf32, #tpu.memory_space<vmem>>, vector<32x32xf32>
    %cst_9 = arith.constant dense<0.000000e+00> : vector<8x32xf32>
    %10 = tpu.matmul %8, %9, %cst_9 {dimension_numbers = #tpu.dot_dimension_numbers<[1], [0], [0], [1], [0, 0, 1, 1], [], []>} : vector<8x32xf32>, vector<32x32xf32>, vector<8x32xf32> -> vector<8x32xf32>
    %c0_10 = arith.constant 0 : index
    %c0_11 = arith.constant 0 : index
    %11 = vector.load %arg5[%c0_10, %c0_11] : memref<1x32xf32, #tpu.memory_space<vmem>>, vector<1x32xf32>
    %12 = vector.broadcast %11 : vector<1x32xf32> to vector<8x32xf32>
    %13 = arith.addf %10, %12 : vector<8x32xf32>
    %14 = math.tanh %13 : vector<8x32xf32>
    %c0_12 = arith.constant 0 : index
    %c0_13 = arith.constant 0 : index
    %15 = vector.load %arg6[%c0_12, %c0_13] : memref<32x288xf32, #tpu.memory_space<vmem>>, vector<32x288xf32>
    %cst_14 = arith.constant dense<0.000000e+00> : vector<8x288xf32>
    %16 = tpu.matmul %14, %15, %cst_14 {dimension_numbers = #tpu.dot_dimension_numbers<[1], [0], [0], [1], [0, 0, 1, 1], [], []>} : vector<8x32xf32>, vector<32x288xf32>, vector<8x288xf32> -> vector<8x288xf32>
    %c0_15 = arith.constant 0 : index
    %c0_16 = arith.constant 0 : index
    %17 = vector.load %arg7[%c0_15, %c0_16] : memref<1x288xf32, #tpu.memory_space<vmem>>, vector<1x288xf32>
    %18 = vector.broadcast %17 : vector<1x288xf32> to vector<8x288xf32>
    %19 = arith.addf %16, %18 : vector<8x288xf32>
    %20 = vector.extract_strided_slice %19 {offsets = [0, 0], sizes = [8, 128], strides = [1, 1]} : vector<8x288xf32> to vector<8x128xf32>
    %21 = vector.extract_strided_slice %19 {offsets = [0, 128], sizes = [8, 128], strides = [1, 1]} : vector<8x288xf32> to vector<8x128xf32>
    %cst_17 = arith.constant -2.000000e+01 : f32
    %cst_18 = arith.constant 2.000000e+01 : f32
    %22 = vector.broadcast %cst_17 : f32 to vector<8x128xf32>
    %23 = arith.maximumf %22, %21 : vector<8x128xf32>
    %24 = vector.broadcast %cst_18 : f32 to vector<8x128xf32>
    %25 = arith.minimumf %24, %23 : vector<8x128xf32>
    %26 = vector.extract_strided_slice %19 {offsets = [0, 256], sizes = [8, 32], strides = [1, 1]} : vector<8x288xf32> to vector<8x32xf32>
    %27 = math.tanh %26 : vector<8x32xf32>
    %28 = arith.truncf %27 : vector<8x32xf32> to vector<8x32xbf16>
    %c0_19 = arith.constant 0 : index
    %c0_20 = arith.constant 0 : index
    %29 = vector.load %arg8[%c0_19, %c0_20] : memref<32x4xbf16, #tpu.memory_space<vmem>>, vector<32x4xbf16>
    %cst_21 = arith.constant dense<0.000000e+00> : vector<8x4xf32>
    %30 = tpu.matmul %28, %29, %cst_21 {dimension_numbers = #tpu.dot_dimension_numbers<[1], [0], [0], [1], [0, 0, 1, 1], [], []>} : vector<8x32xbf16>, vector<32x4xbf16>, vector<8x4xf32> -> vector<8x4xf32>
    %c0_22 = arith.constant 0 : index
    %c0_23 = arith.constant 0 : index
    %31 = vector.load %arg9[%c0_22, %c0_23] : memref<1x4xf32, #tpu.memory_space<vmem>>, vector<1x4xf32>
    %32 = vector.broadcast %31 : vector<1x4xf32> to vector<8x4xf32>
    %33 = arith.addf %30, %32 : vector<8x4xf32>
    %34 = arith.addf %33, %1 : vector<8x4xf32>
    %35 = tpu.iota {dimensions = array<i32: 1>} : vector<8x4xi32>
    %cst_24 = arith.constant dense<0xFF800000> : vector<8xf32>
    %36 = vector.multi_reduction <maximumf>, %34, %cst_24 [1] : vector<8x4xf32> to vector<8xf32>
    %37 = vector.shape_cast %36 : vector<8xf32> to vector<8x1xf32>
    %38 = vector.broadcast %37 : vector<8x1xf32> to vector<8x4xf32>
    %39 = arith.cmpf oge, %34, %38 : vector<8x4xf32>
    %c4_i32 = arith.constant 4 : i32
    %40 = vector.broadcast %c4_i32 : i32 to vector<8x4xi32>
    %41 = arith.select %39, %35, %40 : vector<8x4xi1>, vector<8x4xi32>
    %cst_25 = arith.constant dense<2147483647> : vector<8xi32>
    %42 = vector.multi_reduction <minsi>, %41, %cst_25 [1] : vector<8x4xi32> to vector<8xi32>
    %43 = vector.shape_cast %42 : vector<8xi32> to vector<8x1xi32>
    %cst_26 = arith.constant 5.000000e-01 : f32
    %44 = vector.broadcast %cst_26 : f32 to vector<8x128xf32>
    %45 = arith.mulf %44, %25 : vector<8x128xf32>
    %46 = math.exp %45 : vector<8x128xf32>
    %47 = arith.mulf %2, %46 : vector<8x128xf32>
    %48 = arith.addf %47, %20 : vector<8x128xf32>
    %49 = tpu.iota {dimensions = array<i32: 1>} : vector<8x128xi32>
    %c5_i32 = arith.constant 5 : i32
    %50 = vector.broadcast %c5_i32 : i32 to vector<8x128xi32>
    %51 = arith.shrsi %49, %50 : vector<8x128xi32>
    %52 = vector.broadcast %43 : vector<8x1xi32> to vector<8x128xi32>
    %53 = arith.cmpi eq, %51, %52 : vector<8x128xi32>
    %54 = arith.extui %53 : vector<8x128xi1> to vector<8x128xi32>
    %55 = arith.sitofp %54 : vector<8x128xi32> to vector<8x128xf32>
    %56 = arith.mulf %55, %48 : vector<8x128xf32>
    %57 = arith.mulf %55, %20 : vector<8x128xf32>
    %58 = arith.mulf %55, %25 : vector<8x128xf32>
    %59 = tpu.concatenate %56, %57, %58 in 1 : vector<8x128xf32>, vector<8x128xf32>, vector<8x128xf32> -> vector<8x384xf32>
    %c0_27 = arith.constant 0 : index
    %c0_28 = arith.constant 0 : index
    %60 = vector.load %arg10[%c0_27, %c0_28] : memref<384x128xf32, #tpu.memory_space<vmem>>, vector<384x128xf32>
    %cst_29 = arith.constant dense<0.000000e+00> : vector<8x128xf32>
    %61 = tpu.matmul %59, %60, %cst_29 {dimension_numbers = #tpu.dot_dimension_numbers<[1], [0], [0], [1], [0, 0, 1, 1], [], []>} : vector<8x384xf32>, vector<384x128xf32>, vector<8x128xf32> -> vector<8x128xf32>
    %c0_30 = arith.constant 0 : index
    %c0_31 = arith.constant 0 : index
    %62 = vector.load %arg11[%c0_30, %c0_31] : memref<8x128xf32, #tpu.memory_space<vmem>>, vector<8x128xf32>
    tpu.vector_store %arg11[%c0_30, %c0_31], %61 {strides = array<i32>} : memref<8x128xf32, #tpu.memory_space<vmem>>, vector<8x128xf32>,
    return
  }
  func.func @transform_0(%arg0: i32) -> (i32, i32) {
    %c0_i32 = arith.constant 0 : i32
    %c0_i32_0 = arith.constant 0 : i32
    return %arg0, %c0_i32 : i32, i32
  }
  func.func @transform_1(%arg0: i32) -> (i32, i32) {
    %c0_i32 = arith.constant 0 : i32
    %c0_i32_0 = arith.constant 0 : i32
    %c0_i32_1 = arith.constant 0 : i32
    return %c0_i32, %c0_i32_0 : i32, i32
  }
  func.func @transform_2(%arg0: i32) -> (i32, i32) {
    %c0_i32 = arith.constant 0 : i32
    %c0_i32_0 = arith.constant 0 : i32
    %c0_i32_1 = arith.constant 0 : i32
    return %c0_i32, %c0_i32_0 : i32, i32
  }
  func.func @transform_3(%arg0: i32) -> (i32, i32) {
    %c0_i32 = arith.constant 0 : i32
    %c0_i32_0 = arith.constant 0 : i32
    %c0_i32_1 = arith.constant 0 : i32
    return %c0_i32, %c0_i32_0 : i32, i32
  }
  func.func @transform_4(%arg0: i32) -> (i32, i32) {
    %c0_i32 = arith.constant 0 : i32
    %c0_i32_0 = arith.constant 0 : i32
    %c0_i32_1 = arith.constant 0 : i32
    return %c0_i32, %c0_i32_0 : i32, i32
  }
  func.func @transform_5(%arg0: i32) -> (i32, i32) {
    %c0_i32 = arith.constant 0 : i32
    %c0_i32_0 = arith.constant 0 : i32
    %c0_i32_1 = arith.constant 0 : i32
    return %c0_i32, %c0_i32_0 : i32, i32
  }
  func.func @transform_6(%arg0: i32) -> (i32, i32) {
    %c0_i32 = arith.constant 0 : i32
    %c0_i32_0 = arith.constant 0 : i32
    %c0_i32_1 = arith.constant 0 : i32
    return %c0_i32, %c0_i32_0 : i32, i32
  }
  func.func @transform_7(%arg0: i32) -> (i32, i32) {
    %c0_i32 = arith.constant 0 : i32
    %c0_i32_0 = arith.constant 0 : i32
    %c0_i32_1 = arith.constant 0 : i32
    return %c0_i32, %c0_i32_0 : i32, i32
  }
  func.func @transform_8(%arg0: i32) -> (i32, i32) {
    %c0_i32 = arith.constant 0 : i32
    %c0_i32_0 = arith.constant 0 : i32
    %c0_i32_1 = arith.constant 0 : i32
    return %c0_i32, %c0_i32_0 : i32, i32
  }
  func.func @transform_9(%arg0: i32) -> (i32, i32) {
    %c0_i32 = arith.constant 0 : i32
    %c0_i32_0 = arith.constant 0 : i32
    %c0_i32_1 = arith.constant 0 : i32
    return %c0_i32, %c0_i32_0 : i32, i32
  }
  func.func @transform_10(%arg0: i32) -> (i32, i32) {
    %c0_i32 = arith.constant 0 : i32
    %c0_i32_0 = arith.constant 0 : i32
    return %arg0, %c0_i32 : i32, i32
  }
}

</mosaic_0001>

<llo_original>
// kernel: tpu_custom_call.1
$region0: #{tpu_custom_call.1}
  #allocation0 [shape = 'u32[]', space=smem, size = 0x4, offset = 0x4, fixed_abs, tag = 'smem constant byte address 0x4 - core index']
  #allocation1 [shape = 'u32[144,128]{1,0:T(1,128)}', space=vmem, size = 0x12000, scoped, tag = 'internal scratch']
  %s0 = inlined_call_operand.vmem [shape: f32[8,256], index: 0, kind: input, shape index: {}]
  %s1 = inlined_call_operand.hbm [shape: f32[32,32], index: 1, kind: input, shape index: {}]
  %s2 = inlined_call_operand.vmem [shape: f32[1,32], index: 2, kind: input, shape index: {}]
  %s3 = inlined_call_operand.hbm [shape: f32[32,32], index: 3, kind: input, shape index: {}]
  %s4 = inlined_call_operand.vmem [shape: f32[1,32], index: 4, kind: input, shape index: {}]
  %s5 = inlined_call_operand.hbm [shape: f32[32,288], index: 5, kind: input, shape index: {}]
  %s6 = inlined_call_operand.vmem [shape: f32[1,288], index: 6, kind: input, shape index: {}]
  %s7 = inlined_call_operand.vmem [shape: bf16[32,4], index: 7, kind: input, shape index: {}]
  %s8 = inlined_call_operand.vmem [shape: f32[1,4], index: 8, kind: input, shape index: {}]
  %s9 = inlined_call_operand.hbm [shape: f32[384,128], index: 9, kind: input, shape index: {}]
  %s10 = inlined_call_operand.hbm [shape: f32[8,128], index: 10, kind: output, shape index: {}]
  %s11 = sld [smem:[#allocation0]]
  $region66: #{tpu_custom_call.1} parent=0
    _
  %s13 = ssub.s32 1, %s11
  %s14 = scalar_select 0, %s13, %s11
  $region1: #{tpu_custom_call.1} parent=0
    #allocation2 [shape = 'u8[16384]{0}', space=vmem, size = 0x4000, scoped, tag = 'input window, operand 1, single buffered']
    #allocation3 [shape = 's32[1]{0}', space=sflag, size = 0x4, scoped, tag = 'scoped memory for tpu_custom_call.1']
    #allocation4 [shape = 's32[1]{0}', space=sflag, size = 0x4, scoped, tag = 'scoped memory for tpu_custom_call.1']
    #allocation5 [shape = 'u8[16384]{0}', space=vmem, size = 0x4000, scoped, tag = 'input window, operand 3, single buffered']
    #allocation6 [shape = 's32[1]{0}', space=sflag, size = 0x4, scoped, tag = 'scoped memory for tpu_custom_call.1']
    #allocation7 [shape = 'u8[49152]{0}', space=vmem, size = 0xc000, scoped, tag = 'input window, operand 5, single buffered']
    #allocation8 [shape = 'u8[196608]{0}', space=vmem, size = 0x30000, scoped, tag = 'input window, operand 9, single buffered']
    #allocation9 [shape = 's32[1]{0}', space=sflag, size = 0x4, scoped, tag = 'scoped memory for tpu_custom_call.1']
    #allocation10 [shape = 'u8[4096]{0}', space=vmem, size = 0x1000, scoped, tag = 'output window, operand 0, single buffered']
    %15 = vsyncpa [#allocation3], 0
    %16 = vsyncpa [#allocation6], 0
    %17 = vsyncpa [#allocation9], 0
    %18 = vsyncpa [#allocation4], 0
    // Predicated region
    $region2: #{tpu_custom_call.1} parent=1 // pred_check
      _
    $region3: #{tpu_custom_call.1} parent=1 // pred_check_branch
      %20 = sbr.rel (0) target = $region5
    $region4: #{tpu_custom_call.1} parent=1 // pred_region
      _
    $region5: #{tpu_custom_call.1} parent=1 // pred_fallthru
      _
    // Predicated region
    $region6: #{tpu_custom_call.1} parent=1 // pred_check
      _
    $region7: #{tpu_custom_call.1} parent=1 // pred_check_branch
      %22 = sbr.rel (0) target = $region9
    $region8: #{tpu_custom_call.1} parent=1 // pred_region
      %s24 = ssub.s32 512, 512
      %25 = vsyncadd [#allocation3], %s24
      %s26 = sshll.u32 [#allocation2], 4
      %s27 = int_to_ptr.vmem [resolvable:$true] %s26
      %32 = dma.hbm_to_vmem [thread:$0]  %s1, 512, %s27, [#allocation3], 128, 128, 8
    $region9: #{tpu_custom_call.1} parent=1 // pred_fallthru
      _
    // Predicated region
    $region10: #{tpu_custom_call.1} parent=1 // pred_check
      _
    $region11: #{tpu_custom_call.1} parent=1 // pred_check_branch
      %34 = sbr.rel (0) target = $region13
    $region12: #{tpu_custom_call.1} parent=1 // pred_region
      _
    $region13: #{tpu_custom_call.1} parent=1 // pred_fallthru
      _
    // Predicated region
    $region14: #{tpu_custom_call.1} parent=1 // pred_check
      _
    $region15: #{tpu_custom_call.1} parent=1 // pred_check_branch
      %36 = sbr.rel (0) target = $region17
    $region16: #{tpu_custom_call.1} parent=1 // pred_region
      %s38 = ssub.s32 512, 512
      %39 = vsyncadd [#allocation6], %s38
      %s40 = sshll.u32 [#allocation5], 4
      %s41 = int_to_ptr.vmem [resolvable:$true] %s40
      %46 = dma.hbm_to_vmem [thread:$0]  %s3, 512, %s41, [#allocation6], 128, 128, 8
    $region17: #{tpu_custom_call.1} parent=1 // pred_fallthru
      _
    // Predicated region
    $region18: #{tpu_custom_call.1} parent=1 // pred_check
      _
    $region19: #{tpu_custom_call.1} parent=1 // pred_check_branch
      %48 = sbr.rel (0) target = $region21
    $region20: #{tpu_custom_call.1} parent=1 // pred_region
      _
    $region21: #{tpu_custom_call.1} parent=1 // pred_fallthru
      _
    // Predicated region
    $region22: #{tpu_custom_call.1} parent=1 // pred_check
      _
    $region23: #{tpu_custom_call.1} parent=1 // pred_check_branch
      %50 = sbr.rel (0) target = $region25
    $region24: #{tpu_custom_call.1} parent=1 // pred_region
      %s52 = ssub.s32 1536, 1536
      %53 = vsyncadd [#allocation6], %s52
      %s54 = sshll.u32 [#allocation7], 4
      %s55 = int_to_ptr.vmem [resolvable:$true] %s54
      %60 = dma.hbm_to_vmem [thread:$0]  %s5, 1536, %s55, [#allocation6], 384, 384, 24
    $region25: #{tpu_custom_call.1} parent=1 // pred_fallthru
      _
    // Predicated region
    $region26: #{tpu_custom_call.1} parent=1 // pred_check
      _
    $region27: #{tpu_custom_call.1} parent=1 // pred_check_branch
      %62 = sbr.rel (0) target = $region29
    $region28: #{tpu_custom_call.1} parent=1 // pred_region
      _
    $region29: #{tpu_custom_call.1} parent=1 // pred_fallthru
      _
    // Predicated region
    $region30: #{tpu_custom_call.1} parent=1 // pred_check
      _
    $region31: #{tpu_custom_call.1} parent=1 // pred_check_branch
      %64 = sbr.rel (0) target = $region33
    $region32: #{tpu_custom_call.1} parent=1 // pred_region
      _
    $region33: #{tpu_custom_call.1} parent=1 // pred_fallthru
      _
    // Predicated region
    $region34: #{tpu_custom_call.1} parent=1 // pred_check
      _
    $region35: #{tpu_custom_call.1} parent=1 // pred_check_branch
      %66 = sbr.rel (0) target = $region37
    $region36: #{tpu_custom_call.1} parent=1 // pred_region
      _
    $region37: #{tpu_custom_call.1} parent=1 // pred_fallthru
      _
    // Predicated region
    $region38: #{tpu_custom_call.1} parent=1 // pred_check
      _
    $region39: #{tpu_custom_call.1} parent=1 // pred_check_branch
      %68 = sbr.rel (0) target = $region41
    $region40: #{tpu_custom_call.1} parent=1 // pred_region
      %s70 = ssub.s32 6144, 6144
      %71 = vsyncadd [#allocation9], %s70
      %s72 = sshll.u32 [#allocation8], 4
      %s73 = int_to_ptr.vmem [resolvable:$true] %s72
      %78 = dma.hbm_to_vmem [thread:$0]  %s9, 6144, %s73, [#allocation9], 128, 128, 8
    $region41: #{tpu_custom_call.1} parent=1 // pred_fallthru
      _
    // Predicated region
    $region42: #{tpu_custom_call.1} parent=1 // pred_check
      _
    $region43: #{tpu_custom_call.1} parent=1 // pred_check_branch
      %80 = sbr.rel (0) target = $region45
    $region44: #{tpu_custom_call.1} parent=1 // pred_region
      %81 = dma.done [#allocation3], 512
    $region45: #{tpu_custom_call.1} parent=1 // pred_fallthru
      _
    // Predicated region
    $region46: #{tpu_custom_call.1} parent=1 // pred_check
      _
    $region47: #{tpu_custom_call.1} parent=1 // pred_check_branch
      %83 = sbr.rel (0) target = $region49
    $region48: #{tpu_custom_call.1} parent=1 // pred_region
      %84 = dma.done [#allocation6], 512
    $region49: #{tpu_custom_call.1} parent=1 // pred_fallthru
      _
    // Predicated region
    $region50: #{tpu_custom_call.1} parent=1 // pred_check
      _
    $region51: #{tpu_custom_call.1} parent=1 // pred_check_branch
      %86 = sbr.rel (0) target = $region53
    $region52: #{tpu_custom_call.1} parent=1 // pred_region
      %87 = dma.done [#allocation6], 1536
    $region53: #{tpu_custom_call.1} parent=1 // pred_fallthru
      _
    // Predicated region
    $region54: #{tpu_custom_call.1} parent=1 // pred_check
      _
    $region55: #{tpu_custom_call.1} parent=1 // pred_check_branch
      %89 = sbr.rel (0) target = $region57
    $region56: #{tpu_custom_call.1} parent=1 // pred_region
      %90 = dma.done [#allocation9], 6144
    $region57: #{tpu_custom_call.1} parent=1 // pred_fallthru
      _
    %v92 = vld [vmem:[%s0] sm:$0xff]
    %v93 = vld [vmem:[%s0 + $0x8] sm:$0xff]
    %v94 = vld [vmem:[#allocation2] sm:$0xff]
    %v95 = vld [vmem:[#allocation2 + $0x8] sm:$0xff]
    %v96 = vld [vmem:[#allocation2 + $0x10] sm:$0xff]
    %v97 = vld [vmem:[#allocation2 + $0x18] sm:$0xff]
    %v98 = vld [vmem:[%s2] sm:$0x1]
    %v100 = vlaneseq
    %v101 = vshrl.u32 %v100, 7
    %v102 = vsub.s32 0, %v101
    %v103 = vrot.slane %v98, %v102
    %vm105 = vcmask 261120
    %v107 = vsel %vm105, %v92, 0
    %109 = vmatprep.subr.mxu0 0.0
    %110 = vmatpush1.msra.mxu0 %v94
    %111 = vmatprep.subr.mxu0 0.0
    %112 = vmatpush1.msra.mxu0 %v95
    %113 = vmatprep.subr.mxu0 0.0
    %114 = vmatpush1.msra.mxu0 %v96
    %115 = vmatprep.subr.mxu0 0.0
    %116 = vmatpush1.msra.mxu0 %v97
    %117 = vmatprep.subr.mxu0 0.0
    %118 = vmatpush1.msra.mxu0 0.0
    %119 = vmatprep.subr.mxu0 0.0
    %120 = vmatpush1.msra.mxu0 0.0
    %121 = vmatprep.subr.mxu0 0.0
    %122 = vmatpush1.msra.mxu0 0.0
    %123 = vmatprep.subr.mxu0 0.0
    %124 = vmatpush1.msra.mxu0 0.0
    %125 = vmatprep.subr.mxu0 0.0
    %126 = vmatpush1.msra.mxu0 0.0
    %127 = vmatprep.subr.mxu0 0.0
    %128 = vmatpush1.msra.mxu0 0.0
    %129 = vmatprep.subr.mxu0 0.0
    %130 = vmatpush1.msra.mxu0 0.0
    %131 = vmatprep.subr.mxu0 0.0
    %132 = vmatpush1.msra.mxu0 0.0
    %133 = vmatprep.subr.mxu0 0.0
    %134 = vmatpush1.msra.mxu0 0.0
    %135 = vmatprep.subr.mxu0 0.0
    %136 = vmatpush1.msra.mxu0 0.0
    %137 = vmatprep.subr.mxu0 0.0
    %138 = vmatpush1.msra.mxu0 0.0
    %139 = vmatprep.subr.mxu0 0.0
    %140 = vmatpush1.msra.mxu0 0.0
    %141 = vmatprep.subr.mxu0 0.0
    %142 = vmatpush1.msra.mxu0 0.0
    %143 = vmatprep.subr.mxu0 0.0
    %144 = vmatpush1.msra.mxu0 0.0
    %145 = vmatprep.subr.mxu0 0.0
    %146 = vmatpush1.msra.mxu0 0.0
    %147 = vmatprep.subr.mxu0 0.0
    %148 = vmatpush1.msra.mxu0 0.0
    %149 = vmatprep.subr.mxu0 0.0
    %150 = vmatpush1.msra.mxu0 0.0
    %151 = vmatprep.subr.mxu0 0.0
    %152 = vmatpush1.msra.mxu0 0.0
    %153 = vmatprep.subr.mxu0 0.0
    %154 = vmatpush1.msra.mxu0 0.0
    %155 = vmatprep.subr.mxu0 0.0
    %156 = vmatpush1.msra.mxu0 0.0
    %157 = vmatprep.subr.mxu0 0.0
    %158 = vmatpush1.msra.mxu0 0.0
    %159 = vmatprep.subr.mxu0 0.0
    %160 = vmatpush1.msra.mxu0 0.0
    %161 = vmatprep.subr.mxu0 0.0
    %162 = vmatpush1.msra.mxu0 0.0
    %163 = vmatprep.subr.mxu0 0.0
    %164 = vmatpush1.msra.mxu0 0.0
    %165 = vmatprep.subr.mxu0 0.0
    %166 = vmatpush1.msra.mxu0 0.0
    %167 = vmatprep.subr.mxu0 0.0
    %168 = vmatpush1.msra.mxu0 0.0
    %169 = vmatprep.subr.mxu0 0.0
    %170 = vmatpush1.msra.mxu0 0.0
    %171 = vmatprep.subr.mxu0 0.0
    %172 = vmatpush1.msra.mxu0 0.0
    %173 = vmatprep.mubr.f32.mxu0 0.0
    %174 = vmatmul.mubr.f32.gmra.mrb[0].mxu0 %v107
    %v175 = vpop.f32.mrb[0].mxu0
    %v176 = vadd.f32 %v103, %v175
    %v177 = vpop.f32.mrb[0].mxu0
    %178 = vdwg.mxu0
    %v179 = vtanh.pop %v176
    %v180 = vld [vmem:[#allocation5] sm:$0xff]
    %v181 = vld [vmem:[#allocation5 + $0x8] sm:$0xff]
    %v182 = vld [vmem:[#allocation5 + $0x10] sm:$0xff]
    %v183 = vld [vmem:[#allocation5 + $0x18] sm:$0xff]
    %v184 = vld [vmem:[%s4] sm:$0x1]
    %v186 = vlaneseq
    %v187 = vshrl.u32 %v186, 7
    %v188 = vsub.s32 0, %v187
    %v189 = vrot.slane %v184, %v188
    %v192 = vsel %vm105, %v179, 0
    %194 = vmatprep.subr.mxu0 0.0
    %195 = vmatpush1.msra.mxu0 %v180
    %196 = vmatprep.subr.mxu0 0.0
    %197 = vmatpush1.msra.mxu0 %v181
    %198 = vmatprep.subr.mxu0 0.0
    %199 = vmatpush1.msra.mxu0 %v182
    %200 = vmatprep.subr.mxu0 0.0
    %201 = vmatpush1.msra.mxu0 %v183
    %202 = vmatprep.subr.mxu0 0.0
    %203 = vmatpush1.msra.mxu0 0.0
    %204 = vmatprep.subr.mxu0 0.0
    %205 = vmatpush1.msra.mxu0 0.0
    %206 = vmatprep.subr.mxu0 0.0
    %207 = vmatpush1.msra.mxu0 0.0
    %208 = vmatprep.subr.mxu0 0.0
    %209 = vmatpush1.msra.mxu0 0.0
    %210 = vmatprep.subr.mxu0 0.0
    %211 = vmatpush1.msra.mxu0 0.0
    %212 = vmatprep.subr.mxu0 0.0
    %213 = vmatpush1.msra.mxu0 0.0
    %214 = vmatprep.subr.mxu0 0.0
    %215 = vmatpush1.msra.mxu0 0.0
    %216 = vmatprep.subr.mxu0 0.0
    %217 = vmatpush1.msra.mxu0 0.0
    %218 = vmatprep.subr.mxu0 0.0
    %219 = vmatpush1.msra.mxu0 0.0
    %220 = vmatprep.subr.mxu0 0.0
    %221 = vmatpush1.msra.mxu0 0.0
    %222 = vmatprep.subr.mxu0 0.0
    %223 = vmatpush1.msra.mxu0 0.0
    %224 = vmatprep.subr.mxu0 0.0
    %225 = vmatpush1.msra.mxu0 0.0
    %226 = vmatprep.subr.mxu0 0.0
    %227 = vmatpush1.msra.mxu0 0.0
    %228 = vmatprep.subr.mxu0 0.0
    %229 = vmatpush1.msra.mxu0 0.0
    %230 = vmatprep.subr.mxu0 0.0
    %231 = vmatpush1.msra.mxu0 0.0
    %232 = vmatprep.subr.mxu0 0.0
    %233 = vmatpush1.msra.mxu0 0.0
    %234 = vmatprep.subr.mxu0 0.0
    %235 = vmatpush1.msra.mxu0 0.0
    %236 = vmatprep.subr.mxu0 0.0
    %237 = vmatpush1.msra.mxu0 0.0
    %238 = vmatprep.subr.mxu0 0.0
    %239 = vmatpush1.msra.mxu0 0.0
    %240 = vmatprep.subr.mxu0 0.0
    %241 = vmatpush1.msra.mxu0 0.0
    %242 = vmatprep.subr.mxu0 0.0
    %243 = vmatpush1.msra.mxu0 0.0
    %244 = vmatprep.subr.mxu0 0.0
    %245 = vmatpush1.msra.mxu0 0.0
    %246 = vmatprep.subr.mxu0 0.0
    %247 = vmatpush1.msra.mxu0 0.0
    %248 = vmatprep.subr.mxu0 0.0
    %249 = vmatpush1.msra.mxu0 0.0
    %250 = vmatprep.subr.mxu0 0.0
    %251 = vmatpush1.msra.mxu0 0.0
    %252 = vmatprep.subr.mxu0 0.0
    %253 = vmatpush1.msra.mxu0 0.0
    %254 = vmatprep.subr.mxu0 0.0
    %255 = vmatpush1.msra.mxu0 0.0
    %256 = vmatprep.subr.mxu0 0.0
    %257 = vmatpush1.msra.mxu0 0.0
    %258 = vmatprep.mubr.f32.mxu0 0.0
    %259 = vmatmul.mubr.f32.gmra.mrb[0].mxu0 %v192
    %v260 = vpop.f32.mrb[0].mxu0
    %v261 = vadd.f32 %v189, %v260
    %v262 = vpop.f32.mrb[0].mxu0
    %263 = vdwg.mxu0
    %v264 = vtanh.pop %v261
    %v265 = vld [vmem:[#allocation7] sm:$0xff]
    %v266 = vld [vmem:[#allocation7 + $0x8] sm:$0xff]
    %v267 = vld [vmem:[#allocation7 + $0x10] sm:$0xff]
    %v268 = vld [vmem:[#allocation7 + $0x18] sm:$0xff]
    %v269 = vld [vmem:[#allocation7 + $0x20] sm:$0xff]
    %v270 = vld [vmem:[#allocation7 + $0x28] sm:$0xff]
    %v271 = vld [vmem:[#allocation7 + $0x30] sm:$0xff]
    %v272 = vld [vmem:[#allocation7 + $0x38] sm:$0xff]
    %v273 = vld [vmem:[#allocation7 + $0x40] sm:$0xff]
    %v274 = vld [vmem:[#allocation7 + $0x48] sm:$0xff]
    %v275 = vld [vmem:[#allocation7 + $0x50] sm:$0xff]
    %v276 = vld [vmem:[#allocation7 + $0x58] sm:$0xff]
    %v277 = vld [vmem:[%s6] sm:$0x7]
    %v279 = vlaneseq
    %v280 = vshrl.u32 %v279, 7
    %v281 = vsub.s32 0, %v280
    %v282 = vrot.slane %v277, %v281
    %v283 = vlaneseq
    %v284 = vshrl.u32 %v283, 7
    %v285 = vsub.s32 1, %v284
    %v286 = vrot.slane %v277, %v285
    %v287 = vlaneseq
    %v288 = vshrl.u32 %v287, 7
    %v289 = vsub.s32 2, %v288
    %v290 = vrot.slane %v277, %v289
    %v295 = vsel %vm105, %v264, 0
    %297 = vmatprep.subr.mxu0 %v266
    %298 = vmatpush1.msra.mxu0 %v265
    %299 = vmatprep.subr.mxu0 %v269
    %300 = vmatpush1.msra.mxu0 %v268
    %301 = vmatprep.subr.mxu0 %v272
    %302 = vmatpush1.msra.mxu0 %v271
    %303 = vmatprep.subr.mxu0 %v275
    %304 = vmatpush1.msra.mxu0 %v274
    %305 = vmatprep.subr.mxu0 0.0
    %306 = vmatpush1.msra.mxu0 0.0
    %307 = vmatprep.subr.mxu0 0.0
    %308 = vmatpush1.msra.mxu0 0.0
    %309 = vmatprep.subr.mxu0 0.0
    %310 = vmatpush1.msra.mxu0 0.0
    %311 = vmatprep.subr.mxu0 0.0
    %312 = vmatpush1.msra.mxu0 0.0
    %313 = vmatprep.subr.mxu0 0.0
    %314 = vmatpush1.msra.mxu0 0.0
    %315 = vmatprep.subr.mxu0 0.0
    %316 = vmatpush1.msra.mxu0 0.0
    %317 = vmatprep.subr.mxu0 0.0
    %318 = vmatpush1.msra.mxu0 0.0
    %319 = vmatprep.subr.mxu0 0.0
    %320 = vmatpush1.msra.mxu0 0.0
    %321 = vmatprep.subr.mxu0 0.0
    %322 = vmatpush1.msra.mxu0 0.0
    %323 = vmatprep.subr.mxu0 0.0
    %324 = vmatpush1.msra.mxu0 0.0
    %325 = vmatprep.subr.mxu0 0.0
    %326 = vmatpush1.msra.mxu0 0.0
    %327 = vmatprep.subr.mxu0 0.0
    %328 = vmatpush1.msra.mxu0 0.0
    %329 = vmatprep.subr.mxu0 0.0
    %330 = vmatpush1.msra.mxu0 0.0
    %331 = vmatprep.subr.mxu0 0.0
    %332 = vmatpush1.msra.mxu0 0.0
    %333 = vmatprep.subr.mxu0 0.0
    %334 = vmatpush1.msra.mxu0 0.0
    %335 = vmatprep.subr.mxu0 0.0
    %336 = vmatpush1.msra.mxu0 0.0
    %337 = vmatprep.subr.mxu0 0.0
    %338 = vmatpush1.msra.mxu0 0.0
    %339 = vmatprep.subr.mxu0 0.0
    %340 = vmatpush1.msra.mxu0 0.0
    %341 = vmatprep.subr.mxu0 0.0
    %342 = vmatpush1.msra.mxu0 0.0
    %343 = vmatprep.subr.mxu0 0.0
    %344 = vmatpush1.msra.mxu0 0.0
    %345 = vmatprep.subr.mxu0 0.0
    %346 = vmatpush1.msra.mxu0 0.0
    %347 = vmatprep.subr.mxu0 0.0
    %348 = vmatpush1.msra.mxu0 0.0
    %349 = vmatprep.subr.mxu0 0.0
    %350 = vmatpush1.msra.mxu0 0.0
    %351 = vmatprep.subr.mxu0 0.0
    %352 = vmatpush1.msra.mxu0 0.0
    %353 = vmatprep.subr.mxu0 0.0
    %354 = vmatpush1.msra.mxu0 0.0
    %355 = vmatprep.subr.mxu0 0.0
    %356 = vmatpush1.msra.mxu0 0.0
    %357 = vmatprep.subr.mxu0 0.0
    %358 = vmatpush1.msra.mxu0 0.0
    %359 = vmatprep.subr.mxu0 0.0
    %360 = vmatpush1.msra.mxu0 0.0
    %361 = vmatprep.mubr.f32.mxu0 0.0
    %362 = vmatmul.mubr.f32.gmra.mrb[0].mxu0 %v295
    %v363 = vpop.f32.mrb[0].mxu0
    %v364 = vadd.f32 %v282, %v363
    %v365 = vpop.f32.mrb[0].mxu0
    %v366 = vadd.f32 %v286, %v365
    %367 = vdwg.mxu0
    %368 = vmatprep.subr.mxu0 0.0
    %369 = vmatpush1.msra.mxu0 %v267
    %370 = vmatprep.subr.mxu0 0.0
    %371 = vmatpush1.msra.mxu0 %v270
    %372 = vmatprep.subr.mxu0 0.0
    %373 = vmatpush1.msra.mxu0 %v273
    %374 = vmatprep.subr.mxu0 0.0
    %375 = vmatpush1.msra.mxu0 %v276
    %376 = vmatprep.subr.mxu0 0.0
    %377 = vmatpush1.msra.mxu0 0.0
    %378 = vmatprep.subr.mxu0 0.0
    %379 = vmatpush1.msra.mxu0 0.0
    %380 = vmatprep.subr.mxu0 0.0
    %381 = vmatpush1.msra.mxu0 0.0
    %382 = vmatprep.subr.mxu0 0.0
    %383 = vmatpush1.msra.mxu0 0.0
    %384 = vmatprep.subr.mxu0 0.0
    %385 = vmatpush1.msra.mxu0 0.0
    %386 = vmatprep.subr.mxu0 0.0
    %387 = vmatpush1.msra.mxu0 0.0
    %388 = vmatprep.subr.mxu0 0.0
    %389 = vmatpush1.msra.mxu0 0.0
    %390 = vmatprep.subr.mxu0 0.0
    %391 = vmatpush1.msra.mxu0 0.0
    %392 = vmatprep.subr.mxu0 0.0
    %393 = vmatpush1.msra.mxu0 0.0
    %394 = vmatprep.subr.mxu0 0.0
    %395 = vmatpush1.msra.mxu0 0.0
    %396 = vmatprep.subr.mxu0 0.0
    %397 = vmatpush1.msra.mxu0 0.0
    %398 = vmatprep.subr.mxu0 0.0
    %399 = vmatpush1.msra.mxu0 0.0
    %400 = vmatprep.subr.mxu0 0.0
    %401 = vmatpush1.msra.mxu0 0.0
    %402 = vmatprep.subr.mxu0 0.0
    %403 = vmatpush1.msra.mxu0 0.0
    %404 = vmatprep.subr.mxu0 0.0
    %405 = vmatpush1.msra.mxu0 0.0
    %406 = vmatprep.subr.mxu0 0.0
    %407 = vmatpush1.msra.mxu0 0.0
    %408 = vmatprep.subr.mxu0 0.0
    %409 = vmatpush1.msra.mxu0 0.0
    %410 = vmatprep.subr.mxu0 0.0
    %411 = vmatpush1.msra.mxu0 0.0
    %412 = vmatprep.subr.mxu0 0.0
    %413 = vmatpush1.msra.mxu0 0.0
    %414 = vmatprep.subr.mxu0 0.0
    %415 = vmatpush1.msra.mxu0 0.0
    %416 = vmatprep.subr.mxu0 0.0
    %417 = vmatpush1.msra.mxu0 0.0
    %418 = vmatprep.subr.mxu0 0.0
    %419 = vmatpush1.msra.mxu0 0.0
    %420 = vmatprep.subr.mxu0 0.0
    %421 = vmatpush1.msra.mxu0 0.0
    %422 = vmatprep.subr.mxu0 0.0
    %423 = vmatpush1.msra.mxu0 0.0
    %424 = vmatprep.subr.mxu0 0.0
    %425 = vmatpush1.msra.mxu0 0.0
    %426 = vmatprep.subr.mxu0 0.0
    %427 = vmatpush1.msra.mxu0 0.0
    %428 = vmatprep.subr.mxu0 0.0
    %429 = vmatpush1.msra.mxu0 0.0
    %430 = vmatprep.subr.mxu0 0.0
    %431 = vmatpush1.msra.mxu0 0.0
    %432 = vmatprep.mubr.f32.mxu0 0.0
    %433 = vmatmul.mubr.f32.gmra.mrb[0].mxu0 %v295
    %v434 = vpop.f32.mrb[0].mxu0
    %v435 = vadd.f32 %v290, %v434
    %v436 = vpop.f32.mrb[0].mxu0
    %437 = vdwg.mxu0
    %v438 = vmax.f32 %v366, -20.0
    %v439 = vmin.f32 %v438, 20.0
    %v440 = vtanh.pop %v435
    %v441 = vpack.c.bf16 %v440, %v440
    %v442 = vld [vmem:[%s7] sm:$0xf]
    %v443 = vld [vmem:[%s7 + $0x4] sm:$0xf]
    %v444 = vld [vmem:[%s7 + $0x8] sm:$0xf]
    %v445 = vld [vmem:[%s7 + $0xc] sm:$0xf]
    %v446 = vld [vmem:[%s8] sm:$0x1]
    %v448 = vlaneseq
    %v449 = vshrl.u32 %v448, 7
    %v450 = vsub.s32 0, %v449
    %v451 = vrot.slane %v446, %v450
    %v457 = vunpack.c.l.b16 %v442
    %v458 = vunpack.c.l.b16 %v443
    %v459 = vunpack.c.l.b16 %v444
    %v460 = vunpack.c.l.b16 %v445
    %v461 = vpack.c.b16 %v458, %v457
    %v462 = vpack.c.b16 %v460, %v459
    %v466 = vsel %vm105, %v441, 0
    %468 = vmatprep.subr.bf16.mxu0 0
    %469 = vmatpush1.bf16.msra.mxu0 %v461
    %470 = vmatprep.subr.bf16.mxu0 0
    %471 = vmatpush1.bf16.msra.mxu0 %v462
    %472 = vmatprep.subr.bf16.mxu0 0
    %473 = vmatpush1.bf16.msra.mxu0 0
    %474 = vmatprep.subr.bf16.mxu0 0
    %475 = vmatpush1.bf16.msra.mxu0 0
    %476 = vmatprep.subr.bf16.mxu0 0
    %477 = vmatpush1.bf16.msra.mxu0 0
    %478 = vmatprep.subr.bf16.mxu0 0
    %479 = vmatpush1.bf16.msra.mxu0 0
    %480 = vmatprep.subr.bf16.mxu0 0
    %481 = vmatpush1.bf16.msra.mxu0 0
    %482 = vmatprep.subr.bf16.mxu0 0
    %483 = vmatpush1.bf16.msra.mxu0 0
    %484 = vmatprep.subr.bf16.mxu0 0
    %485 = vmatpush1.bf16.msra.mxu0 0
    %486 = vmatprep.subr.bf16.mxu0 0
    %487 = vmatpush1.bf16.msra.mxu0 0
    %488 = vmatprep.subr.bf16.mxu0 0
    %489 = vmatpush1.bf16.msra.mxu0 0
    %490 = vmatprep.subr.bf16.mxu0 0
    %491 = vmatpush1.bf16.msra.mxu0 0
    %492 = vmatprep.subr.bf16.mxu0 0
    %493 = vmatpush1.bf16.msra.mxu0 0
    %494 = vmatprep.subr.bf16.mxu0 0
    %495 = vmatpush1.bf16.msra.mxu0 0
    %496 = vmatprep.subr.bf16.mxu0 0
    %497 = vmatpush1.bf16.msra.mxu0 0
    %498 = vmatprep.subr.bf16.mxu0 0
    %499 = vmatpush1.bf16.msra.mxu0 0
    %500 = vmatprep.mubr.bf16.mxu0 0
    %501 = vmatmul.mubr.bf16.gmra.mrb[0].mxu0 %v466
    %v502 = vpop.f32.mrb[0].mxu0
    %v503 = vadd.f32 %v451, %v502
    %v504 = vpop.f32.mrb[0].mxu0
    %v505 = vpop.f32.mrb[0].mxu0
    %v506 = vpop.f32.mrb[0].mxu0
    %507 = vdwg.mxu0
    %508 = vrot.lane.b32.xlu0 %v92, 96
    %v509 = vpop.permute.xlu0 %508
    %v511 = vadd.f32 %v503, %v509
    %v512 = vlaneseq
    %v513 = vand.u32 %v512, 127
    %vm514 = vcmask 31744
    %v515 = vsel %vm514, %v511, -inf
    %516 = vmax.xlane.f32.xlu0 %v515
    %v517 = vpop.xlane.xlu0 %516
    %vm518 = vcmp.ge.f32.partialorder %v511, %v517
    %v519 = vsel %vm518, %v513, 4
    %v520 = vsel %vm514, %v519, 2147483647
    %v521 = vand.u32 %v520, 65535
    %v522 = vshra.s32 %v520, 16
    %v523 = vcvt.s32.f32 %v521
    %v524 = vcvt.s32.f32 %v522
    %525 = vmin.xlane.f32.xlu0 %v524
    %v526 = vpop.xlane.xlu0 %525
    %vm527 = vcmp.eq.f32.partialorder %v524, %v526
    %v528 = vsel %vm527, %v523, inf
    %529 = vmin.xlane.f32.xlu0 %v528
    %v530 = vpop.xlane.xlu0 %529
    %v531 = vcvt.f32.s32 %v530
    %v532 = vcvt.f32.s32 %v526
    %v533 = vshll.u32 %v532, 16
    %v534 = vadd.s32 %v533, %v531
    %v535 = vmul.f32 %v439, 0.5
    %v536 = vmul.f32 %v535, 1.442695
    %v537 = vpow.pop %v536
    %v538 = vmul.f32 %v93, %v537
    %v539 = vadd.f32 %v538, %v364
    %v540 = vshra.s32 %v513, 5
    %vm541 = vcmp.eq.s32.totalorder %v540, %v534
    %v542 = vsel %vm541, 1, 0
    %v543 = vcvt.s32.f32 %v542
    %v544 = vmul.f32 %v543, %v539
    %v545 = vmul.f32 %v543, %v364
    %v546 = vmul.f32 %v543, %v439
    %v547 = vld [vmem:[#allocation8] sm:$0xff]
    %v548 = vld [vmem:[#allocation8 + $0x8] sm:$0xff]
    %v549 = vld [vmem:[#allocation8 + $0x10] sm:$0xff]
    %v550 = vld [vmem:[#allocation8 + $0x18] sm:$0xff]
    %v551 = vld [vmem:[#allocation8 + $0x20] sm:$0xff]
    %v552 = vld [vmem:[#allocation8 + $0x28] sm:$0xff]
    %v553 = vld [vmem:[#allocation8 + $0x30] sm:$0xff]
    %v554 = vld [vmem:[#allocation8 + $0x38] sm:$0xff]
    %v555 = vld [vmem:[#allocation8 + $0x40] sm:$0xff]
    %v556 = vld [vmem:[#allocation8 + $0x48] sm:$0xff]
    %v557 = vld [vmem:[#allocation8 + $0x50] sm:$0xff]
    %v558 = vld [vmem:[#allocation8 + $0x58] sm:$0xff]
    %v559 = vld [vmem:[#allocation8 + $0x60] sm:$0xff]
    %v560 = vld [vmem:[#allocation8 + $0x68] sm:$0xff]
    %v561 = vld [vmem:[#allocation8 + $0x70] sm:$0xff]
    %v562 = vld [vmem:[#allocation8 + $0x78] sm:$0xff]
    %v563 = vld [vmem:[#allocation8 + $0x80] sm:$0xff]
    %v564 = vld [vmem:[#allocation8 + $0x88] sm:$0xff]
    %v565 = vld [vmem:[#allocation8 + $0x90] sm:$0xff]
    %v566 = vld [vmem:[#allocation8 + $0x98] sm:$0xff]
    %v567 = vld [vmem:[#allocation8 + $0xa0] sm:$0xff]
    %v568 = vld [vmem:[#allocation8 + $0xa8] sm:$0xff]
    %v569 = vld [vmem:[#allocation8 + $0xb0] sm:$0xff]
    %v570 = vld [vmem:[#allocation8 + $0xb8] sm:$0xff]
    %v571 = vld [vmem:[#allocation8 + $0xc0] sm:$0xff]
    %v572 = vld [vmem:[#allocation8 + $0xc8] sm:$0xff]
    %v573 = vld [vmem:[#allocation8 + $0xd0] sm:$0xff]
    %v574 = vld [vmem:[#allocation8 + $0xd8] sm:$0xff]
    %v575 = vld [vmem:[#allocation8 + $0xe0] sm:$0xff]
    %v576 = vld [vmem:[#allocation8 + $0xe8] sm:$0xff]
    %v577 = vld [vmem:[#allocation8 + $0xf0] sm:$0xff]
    %v578 = vld [vmem:[#allocation8 + $0xf8] sm:$0xff]
    %v579 = vld [vmem:[#allocation8 + $0x100] sm:$0xff]
    %v580 = vld [vmem:[#allocation8 + $0x108] sm:$0xff]
    %v581 = vld [vmem:[#allocation8 + $0x110] sm:$0xff]
    %v582 = vld [vmem:[#allocation8 + $0x118] sm:$0xff]
    %v583 = vld [vmem:[#allocation8 + $0x120] sm:$0xff]
    %v584 = vld [vmem:[#allocation8 + $0x128] sm:$0xff]
    %v585 = vld [vmem:[#allocation8 + $0x130] sm:$0xff]
    %v586 = vld [vmem:[#allocation8 + $0x138] sm:$0xff]
    %v587 = vld [vmem:[#allocation8 + $0x140] sm:$0xff]
    %v588 = vld [vmem:[#allocation8 + $0x148] sm:$0xff]
    %v589 = vld [vmem:[#allocation8 + $0x150] sm:$0xff]
    %v590 = vld [vmem:[#allocation8 + $0x158] sm:$0xff]
    %v591 = vld [vmem:[#allocation8 + $0x160] sm:$0xff]
    %v592 = vld [vmem:[#allocation8 + $0x168] sm:$0xff]
    %v593 = vld [vmem:[#allocation8 + $0x170] sm:$0xff]
    %v594 = vld [vmem:[#allocation8 + $0x178] sm:$0xff]
    %595 = vmatprep.subr.mxu0 0.0
    %596 = vmatpush1.msra.mxu0 %v547
    %597 = vmatprep.subr.mxu0 0.0
    %598 = vmatpush1.msra.mxu0 %v548
    %599 = vmatprep.subr.mxu0 0.0
    %600 = vmatpush1.msra.mxu0 %v549
    %601 = vmatprep.subr.mxu0 0.0
    %602 = vmatpush1.msra.mxu0 %v550
    %603 = vmatprep.subr.mxu0 0.0
    %604 = vmatpush1.msra.mxu0 %v551
    %605 = vmatprep.subr.mxu0 0.0
    %606 = vmatpush1.msra.mxu0 %v552
    %607 = vmatprep.subr.mxu0 0.0
    %608 = vmatpush1.msra.mxu0 %v553
    %609 = vmatprep.subr.mxu0 0.0
    %610 = vmatpush1.msra.mxu0 %v554
    %611 = vmatprep.subr.mxu0 0.0
    %612 = vmatpush1.msra.mxu0 %v555
    %613 = vmatprep.subr.mxu0 0.0
    %614 = vmatpush1.msra.mxu0 %v556
    %615 = vmatprep.subr.mxu0 0.0
    %616 = vmatpush1.msra.mxu0 %v557
    %617 = vmatprep.subr.mxu0 0.0
    %618 = vmatpush1.msra.mxu0 %v558
    %619 = vmatprep.subr.mxu0 0.0
    %620 = vmatpush1.msra.mxu0 %v559
    %621 = vmatprep.subr.mxu0 0.0
    %622 = vmatpush1.msra.mxu0 %v560
    %623 = vmatprep.subr.mxu0 0.0
    %624 = vmatpush1.msra.mxu0 %v561
    %625 = vmatprep.subr.mxu0 0.0
    %626 = vmatpush1.msra.mxu0 %v562
    %627 = vmatprep.subr.mxu0 0.0
    %628 = vmatpush1.msra.mxu0 %v563
    %629 = vmatprep.subr.mxu0 0.0
    %630 = vmatpush1.msra.mxu0 %v564
    %631 = vmatprep.subr.mxu0 0.0
    %632 = vmatpush1.msra.mxu0 %v565
    %633 = vmatprep.subr.mxu0 0.0
    %634 = vmatpush1.msra.mxu0 %v566
    %635 = vmatprep.subr.mxu0 0.0
    %636 = vmatpush1.msra.mxu0 %v567
    %637 = vmatprep.subr.mxu0 0.0
    %638 = vmatpush1.msra.mxu0 %v568
    %639 = vmatprep.subr.mxu0 0.0
    %640 = vmatpush1.msra.mxu0 %v569
    %641 = vmatprep.subr.mxu0 0.0
    %642 = vmatpush1.msra.mxu0 %v570
    %643 = vmatprep.subr.mxu0 0.0
    %644 = vmatpush1.msra.mxu0 %v571
    %645 = vmatprep.subr.mxu0 0.0
    %646 = vmatpush1.msra.mxu0 %v572
    %647 = vmatprep.subr.mxu0 0.0
    %648 = vmatpush1.msra.mxu0 %v573
    %649 = vmatprep.subr.mxu0 0.0
    %650 = vmatpush1.msra.mxu0 %v574
    %651 = vmatprep.subr.mxu0 0.0
    %652 = vmatpush1.msra.mxu0 %v575
    %653 = vmatprep.subr.mxu0 0.0
    %654 = vmatpush1.msra.mxu0 %v576
    %655 = vmatprep.subr.mxu0 0.0
    %656 = vmatpush1.msra.mxu0 %v577
    %657 = vmatprep.subr.mxu0 0.0
    %658 = vmatpush1.msra.mxu0 %v578
    %659 = vmatprep.mubr.f32.mxu0 %v545
    %660 = vmatmul.mubr.f32.gmra.mrb[0].mxu0 %v544
    %v661 = vpop.f32.mrb[0].mxu0
    %v662 = vadd.f32 0.0, %v661
    %v663 = vpop.f32.mrb[0].mxu0
    %664 = vdwg.mxu0
    %665 = vmatprep.subr.mxu0 0.0
    %666 = vmatpush1.msra.mxu0 %v579
    %667 = vmatprep.subr.mxu0 0.0
    %668 = vmatpush1.msra.mxu0 %v580
    %669 = vmatprep.subr.mxu0 0.0
    %670 = vmatpush1.msra.mxu0 %v581
    %671 = vmatprep.subr.mxu0 0.0
    %672 = vmatpush1.msra.mxu0 %v582
    %673 = vmatprep.subr.mxu0 0.0
    %674 = vmatpush1.msra.mxu0 %v583
    %675 = vmatprep.subr.mxu0 0.0
    %676 = vmatpush1.msra.mxu0 %v584
    %677 = vmatprep.subr.mxu0 0.0
    %678 = vmatpush1.msra.mxu0 %v585
    %679 = vmatprep.subr.mxu0 0.0
    %680 = vmatpush1.msra.mxu0 %v586
    %681 = vmatprep.subr.mxu0 0.0
    %682 = vmatpush1.msra.mxu0 %v587
    %683 = vmatprep.subr.mxu0 0.0
    %684 = vmatpush1.msra.mxu0 %v588
    %685 = vmatprep.subr.mxu0 0.0
    %686 = vmatpush1.msra.mxu0 %v589
    %687 = vmatprep.subr.mxu0 0.0
    %688 = vmatpush1.msra.mxu0 %v590
    %689 = vmatprep.subr.mxu0 0.0
    %690 = vmatpush1.msra.mxu0 %v591
    %691 = vmatprep.subr.mxu0 0.0
    %692 = vmatpush1.msra.mxu0 %v592
    %693 = vmatprep.subr.mxu0 0.0
    %694 = vmatpush1.msra.mxu0 %v593
    %695 = vmatprep.subr.mxu0 0.0
    %696 = vmatpush1.msra.mxu0 %v594
    %697 = vmatprep.subr.mxu0 0.0
    %698 = vmatpush1.msra.mxu0 0.0
    %699 = vmatprep.subr.mxu0 0.0
    %700 = vmatpush1.msra.mxu0 0.0
    %701 = vmatprep.subr.mxu0 0.0
    %702 = vmatpush1.msra.mxu0 0.0
    %703 = vmatprep.subr.mxu0 0.0
    %704 = vmatpush1.msra.mxu0 0.0
    %705 = vmatprep.subr.mxu0 0.0
    %706 = vmatpush1.msra.mxu0 0.0
    %707 = vmatprep.subr.mxu0 0.0
    %708 = vmatpush1.msra.mxu0 0.0
    %709 = vmatprep.subr.mxu0 0.0
    %710 = vmatpush1.msra.mxu0 0.0
    %711 = vmatprep.subr.mxu0 0.0
    %712 = vmatpush1.msra.mxu0 0.0
    %713 = vmatprep.subr.mxu0 0.0
    %714 = vmatpush1.msra.mxu0 0.0
    %715 = vmatprep.subr.mxu0 0.0
    %716 = vmatpush1.msra.mxu0 0.0
    %717 = vmatprep.subr.mxu0 0.0
    %718 = vmatpush1.msra.mxu0 0.0
    %719 = vmatprep.subr.mxu0 0.0
    %720 = vmatpush1.msra.mxu0 0.0
    %721 = vmatprep.subr.mxu0 0.0
    %722 = vmatpush1.msra.mxu0 0.0
    %723 = vmatprep.subr.mxu0 0.0
    %724 = vmatpush1.msra.mxu0 0.0
    %725 = vmatprep.subr.mxu0 0.0
    %726 = vmatpush1.msra.mxu0 0.0
    %727 = vmatprep.subr.mxu0 0.0
    %728 = vmatpush1.msra.mxu0 0.0
    %729 = vmatprep.mubr.f32.mxu0 0.0
    %730 = vmatmul.mubr.f32.gmra.mrb[0].mxu0 %v546
    %v731 = vpop.f32.mrb[0].mxu0
    %v732 = vadd.f32 %v662, %v731
    %v733 = vpop.f32.mrb[0].mxu0
    %734 = vdwg.mxu0
    %735 = vst [vmem:[#allocation10] sm:$0xff] %v732
    // Predicated region
    $region58: #{tpu_custom_call.1} parent=1 // pred_check
      _
    $region59: #{tpu_custom_call.1} parent=1 // pred_check_branch
      %737 = sbr.rel (0) target = $region61
    $region60: #{tpu_custom_call.1} parent=1 // pred_region
      %s739 = ssub.s32 128, 128
      %740 = vsyncadd [#allocation4], %s739
      %s742 = sshll.u32 [#allocation10], 4
      %s743 = int_to_ptr.vmem [resolvable:$true] %s742
      %745 = dma.vmem_to_hbm [thread:$0]  %s743, 128, %s10, [#allocation4]
    $region61: #{tpu_custom_call.1} parent=1 // pred_fallthru
      _
    // Predicated region
    $region62: #{tpu_custom_call.1} parent=1 // pred_check
      _
    $region63: #{tpu_custom_call.1} parent=1 // pred_check_branch
      %747 = sbr.rel (0) target = $region65
    $region64: #{tpu_custom_call.1} parent=1 // pred_region
      %748 = dma.done [#allocation4], 128
    $region65: #{tpu_custom_call.1} parent=1 // pred_fallthru
      _
    %749 = vsyncpa [#allocation3], 1
    %750 = vsyncpa [#allocation6], 1
    %751 = vsyncpa [#allocation9], 1
    %752 = vsyncpa [#allocation4], 1

</llo_original>
